<compile_context>
chip_gen: v7x
topology: tpu7x:2x2x1
jax: 0.10.0
libtpu: 0.0.40
codegen_flags: <defaults>
</compile_context>

<pallas_src>
import jax
import jax.numpy as jnp
from jax import lax
from jax.experimental import pallas as pl
from jax.experimental.pallas import tpu as pltpu


def _cmap_energy_kernel(ram_ref, upd_ref, out_ref):
    # ram_ref: (TILE_N, G); upd_ref: (1, G); out_ref: (1, 1, TILE_N)
    # Fused multiply + (phi, psi) reduce as one MXU contraction over G,
    # producing a lane-dense (1, TILE_N) row.
    e = lax.dot_general(
        upd_ref[...], ram_ref[...],
        dimension_numbers=(((1,), (1,)), ((), ())),
        preferred_element_type=jnp.float32,
    )  # (1, TILE_N) f32
    out_ref[0] = e.astype(out_ref.dtype)


def _round_up(x, m):
    return ((x + m - 1) // m) * m


def _pick_tile_n(n):
    """Generation-aware tile size (fits default scoped VMEM, double-buffered)."""
    cap = 2048  # safe on v5e's 16 MiB default scoped-VMEM limit
    try:
        kind = jax.devices()[0].device_kind.lower()
        if "v6" in kind or "v7" in kind:
            cap = 4096  # 2 x ~10 MiB fits the 32 MiB default scoped limit
    except Exception:  # pragma: no cover - defensive; keep the safe cap
        pass
    tile = min(cap, _round_up(n, 16))  # multiple of 16 (bf16 sublane packing)
    # Ensure >= 2 grid steps when possible so v7x megacore can split the
    # "parallel" axis (no-op on single-TC v5e/v6e).
    if n > 16 and tile >= n:
        tile = max(16, _round_up(pl.cdiv(n, 2), 16))
    return tile


def deep_reweighting(ramachandran, update, *, pallas_min_rows=4096):
    """Forward pass of DeepReweighting.

    ramachandran: (..., PHI, PSI) phi/psi distributions. A leading size-1 axis
                  is squeezed, matching torch's ``.squeeze(0)``.
    update:       (PHI, PSI) CMAP parameter grid.

    Returns (per-conformation CMAP energy, update * 1.0).
    """
    update_copy = update * 1.0  # pure identity; done outside the kernel

    ram = ramachandran
    if ram.ndim > 2 and ram.shape[0] == 1:  # torch .squeeze(0)
        ram = ram.reshape(ram.shape[1:])
    gphi, gpsi = ram.shape[-2:]
    assert (gphi, gpsi) == tuple(update.shape), (
        "last two dims of ramachandran must match the update grid")
    # TODO(synk): exotic broadcasting (size-1 grid dims in ramachandran) not handled.
    lead_shape = ram.shape[:-2]
    n = 1
    for d in lead_shape:
        n *= int(d)
    g = gphi * gpsi
    out_dtype = jnp.result_type(ramachandran.dtype, update.dtype)

    # Keep bf16/f32 in their native dtype (kernel is HBM-BW bound; MXU still
    # accumulates in f32 via preferred_element_type).
    compute_dtype = ram.dtype if ram.dtype in (jnp.bfloat16, jnp.float32) else jnp.float32
    ram2 = ram.reshape(n, g).astype(compute_dtype)
    upd_row = update.reshape(1, g).astype(compute_dtype)

    if n < pallas_min_rows:
        # Tiny problems: fixed custom-call / DMA-setup overhead dwarfs the work.
        energy_flat = jnp.einsum(
            "ng,g->n", ram2, upd_row.reshape(-1),
            preferred_element_type=jnp.float32)
    else:
        tile_n = _pick_tile_n(n)
        num_tiles = pl.cdiv(n, tile_n)
        out = pl.pallas_call(
            _cmap_energy_kernel,
            out_shape=jax.ShapeDtypeStruct((num_tiles, 1, tile_n), jnp.float32),
            grid_spec=pltpu.PrefetchScalarGridSpec(
                num_scalar_prefetch=0,
                grid=(num_tiles,),
                in_specs=[
                    # Ragged final block: rows past n read unspecified VMEM, but
                    # each output element depends only on its own input row and
                    # padded rows are sliced off below (no jnp.pad copy).
                    pl.BlockSpec((tile_n, g), lambda i: (i, 0)),
                    # Resident (1, G) update row: constant index -> DMA'd once.
                    pl.BlockSpec((1, g), lambda i: (0, 0)),
                ],
                out_specs=pl.BlockSpec((1, 1, tile_n), lambda i: (i, 0, 0)),
            ),
            compiler_params=pltpu.CompilerParams(
                dimension_semantics=("parallel",),
            ),
            cost_estimate=pl.CostEstimate(
                flops=2 * n * g,
                transcendentals=0,
                bytes_accessed=n * g * ram2.dtype.itemsize + g * 4 + n * 4,
            ),
        )(ram2, upd_row)
        energy_flat = out.reshape(-1)[:n]

    energy = energy_flat.reshape(lead_shape).astype(out_dtype)
    return energy, update_copy


if __name__ == "__main__":
    key = jax.random.PRNGKey(0)
    k_ram, k_upd, k_batch = jax.random.split(key, 3)

    # Small demo: 200 conformations on the 24x24 phi/psi grid. N is chosen so
    # the Pallas path runs with 2 grid steps and a ragged final block.
    N, PHI, PSI = 200, 24, 24
    ramachandran = jax.random.uniform(k_ram, (1, N, PHI, PSI), dtype=jnp.float32)
    update = 0.01 * jax.random.normal(k_upd, (PHI, PSI), dtype=jnp.float32)

    # Force the Pallas path at this small demo size (default wrapper behaviour
    # routes tiny N to a fused XLA einsum).
    energy, update_copy = deep_reweighting(ramachandran, update, pallas_min_rows=1)
    energy = jax.block_until_ready(energy)
    update_copy = jax.block_until_ready(update_copy)

    ref_energy = jnp.sum(jnp.squeeze(ramachandran * update, axis=0), axis=(-2, -1))
    ref_copy = update * 1.0
    assert energy.shape == (N,)
    assert update_copy.shape == (PHI, PSI)
    assert jnp.allclose(energy, ref_energy, atol=1e-5, rtol=1e-5)
    assert jnp.allclose(update_copy, ref_copy)

    # Default (small-N einsum bypass) path gives the same answer.
    energy2, _ = deep_reweighting(ramachandran, update)
    assert jnp.allclose(jax.block_until_ready(energy2), ref_energy, atol=1e-5, rtol=1e-5)

    # Batched leading dims (torch squeeze(0) is a no-op when B != 1).
    ram4 = jax.random.uniform(k_batch, (3, 5, PHI, PSI), dtype=jnp.float32)
    e4, _ = deep_reweighting(ram4, update)
    e4 = jax.block_until_ready(e4)
    assert e4.shape == (3, 5)
    assert jnp.allclose(e4, jnp.sum(ram4 * update, axis=(-2, -1)), atol=1e-5, rtol=1e-5)

    print("KERNEL_OK")
</pallas_src>

<mosaic_0001>
module attributes {stable_mosaic.version = 11 : i64} {
  func.func @_cmap_energy_kernel(%arg0: i32, %arg1: memref<112x576xf32, #tpu.memory_space<vmem>>, %arg2: memref<1x576xf32, #tpu.memory_space<vmem>>, %arg3: memref<1x1x112xf32, #tpu.memory_space<vmem>>) attributes {dimension_semantics = [#tpu.dimension_semantics<parallel>], iteration_bounds = array<i64: 2>, scalar_prefetch = 0 : i64, scratch_operands = 0 : i64, tpu.core_type = #tpu.core_type<tc>, window_params = [{transform_indices = @transform_0, window_bounds = array<i64: 112, 576>}, {pipeline_mode = #tpu.pipeline_mode<synchronous>, transform_indices = @transform_1, window_bounds = array<i64: 1, 576>}, {transform_indices = @transform_2, window_bounds = array<i64: 1, 1, 112>}]} {
    %c0 = arith.constant 0 : index
    %c0_0 = arith.constant 0 : index
    %0 = vector.load %arg2[%c0, %c0_0] : memref<1x576xf32, #tpu.memory_space<vmem>>, vector<1x576xf32>
    %c0_1 = arith.constant 0 : index
    %c0_2 = arith.constant 0 : index
    %1 = vector.load %arg1[%c0_1, %c0_2] : memref<112x576xf32, #tpu.memory_space<vmem>>, vector<112x576xf32>
    %cst = arith.constant dense<0.000000e+00> : vector<1x112xf32>
    %2 = tpu.matmul %0, %1, %cst {dimension_numbers = #tpu.dot_dimension_numbers<[1], [1], [0], [0], [0, 0, 1, 0], [], []>} : vector<1x576xf32>, vector<112x576xf32>, vector<1x112xf32> -> vector<1x112xf32>
    %c0_3 = arith.constant 0 : index
    %c0_4 = arith.constant 0 : index
    %c0_5 = arith.constant 0 : index
    %3 = vector.load %arg3[%c0_3, %c0_4, %c0_5] : memref<1x1x112xf32, #tpu.memory_space<vmem>>, vector<1x1x112xf32>
    %4 = vector.shape_cast %3 : vector<1x1x112xf32> to vector<1x112xf32>
    %5 = vector.shape_cast %2 : vector<1x112xf32> to vector<1x1x112xf32>
    tpu.vector_store %arg3[%c0_3, %c0_4, %c0_5], %5 {strides = array<i32>} : memref<1x1x112xf32, #tpu.memory_space<vmem>>, vector<1x1x112xf32>,
    return
  }
  func.func @transform_0(%arg0: i32) -> (i32, i32) {
    %c0_i32 = arith.constant 0 : i32
    %c0_i32_0 = arith.constant 0 : i32
    return %arg0, %c0_i32 : i32, i32
  }
  func.func @transform_1(%arg0: i32) -> (i32, i32) {
    %c0_i32 = arith.constant 0 : i32
    %c0_i32_0 = arith.constant 0 : i32
    %c0_i32_1 = arith.constant 0 : i32
    return %c0_i32, %c0_i32_0 : i32, i32
  }
  func.func @transform_2(%arg0: i32) -> (i32, i32, i32) {
    %c0_i32 = arith.constant 0 : i32
    %c0_i32_0 = arith.constant 0 : i32
    %c0_i32_1 = arith.constant 0 : i32
    return %arg0, %c0_i32, %c0_i32_0 : i32, i32, i32
  }
}

</mosaic_0001>

<llo_original>
// kernel: tpu_custom_call.1
$region0: #{tpu_custom_call.1}
  #allocation0 [shape = 'u32[]', space=smem, size = 0x4, offset = 0x4, fixed_abs, tag = 'smem constant byte address 0x4 - core index']
  #allocation1 [shape = 'u32[144,128]{1,0:T(1,128)}', space=vmem, size = 0x12000, scoped, tag = 'internal scratch']
  %s0 = inlined_call_operand.hbm [shape: f32[200,576], index: 0, kind: input, shape index: {}]
  %s1 = inlined_call_operand.hbm [shape: f32[1,576], index: 1, kind: input, shape index: {}]
  %s2 = inlined_call_operand.hbm [shape: f32[2,1,112], index: 2, kind: output, shape index: {}]
  %s3 = sld [smem:[#allocation0]]
  $region49: #{tpu_custom_call.1} parent=0
    _
  %s5 = ssub.s32 1, %s3
  %s6 = scalar_select 0, %s5, %s3
  $region1: #{tpu_custom_call.1} parent=0
    #allocation2 [shape = 'u8[573440]{0}', space=vmem, size = 0x8c000, scoped, tag = 'input window, operand 0']
    #allocation3 [shape = 's32[2]{0}', space=sflag, size = 0x8, scoped, tag = 'scoped memory for tpu_custom_call.1']
    #allocation4 [shape = 's32[2]{0}', space=sflag, size = 0x8, scoped, tag = 'scoped memory for tpu_custom_call.1']
    #allocation5 [shape = 'u8[2560]{0}', space=vmem, size = 0xc00, scoped, tag = 'input window, operand 1, single buffered']
    #allocation6 [shape = 's32[1]{0}', space=sflag, size = 0x4, scoped, tag = 'scoped memory for tpu_custom_call.1']
    #allocation7 [shape = 'u8[1024]{0}', space=vmem, size = 0x400, scoped, tag = 'output window, operand 0']
    %7 = vsyncpa [#allocation3], 0
    %s8 = scalar_lea.sflag [#allocation3], 1
    %9 = vsyncpa %s8, 0
    %10 = vsyncpa [#allocation6], 0
    %11 = vsyncpa [#allocation4], 0
    %s12 = scalar_lea.sflag [#allocation4], 1
    %13 = vsyncpa %s12, 0
    loop: start=0, step=1, limit=4
    $region2: #{tpu_custom_call.1} parent=1 // loop_pre_header
      _
    $region3: #{tpu_custom_call.1} parent=1 // loop_header
      %s15 = sphi 0, %s19
      %p16 = scmp.ge.s32.totalorder %s15, 4
      %s25 = sphi 0, %s27
      %s28 = sphi 0, %s25
      %s29 = sphi 0, %s28
      %s45 = sphi 0, %s29
      %s49 = sphi 0, %s49
      %s51 = sphi 0, %s49
      %s52 = sphi 0, %s51
      %s66 = sphi 0, %s52
      %s72 = sphi 0, %s74
      %s75 = sphi 0, %s72
      %s76 = sphi 0, %s75
      %s92 = sphi 0, %s76
    $region4: #{tpu_custom_call.1} parent=1 // loop_header_branch
      %18 = sbr.rel (%p16) target = $region8
    $region5: #{tpu_custom_call.1} parent=1 // loop_body
      %s20 = ssub.s32 %s15, 1
      %s21 = ssub.s32 %s15, 2
      %s22 = sadd.s32 %s15, 1
      %s23 = ssub.s32 %s15, %s22
      %p24 = scmp.eq.s32.totalorder %s23, 0
      %s26 = sadd.s32 %s25, 1
      %s27 = scalar_select %p24, %s25, %s26
      %p30 = pneg %p24
      %p31 = scmp.eq.s32.totalorder %s15, 1
      %p32 = por %p30, %p31
      %p33 = scmp.ne.s32.totalorder %s25, %s28
      %p34 = scmp.eq.s32.totalorder %s15, 0
      %p35 = por %p33, %p34
      %p36 = scmp.ne.s32.totalorder %s25, %s28
      %p37 = scmp.eq.s32.totalorder %s20, 1
      %p38 = por %p36, %p37
      %p39 = scmp.ne.s32.totalorder %s28, %s29
      %p40 = scmp.eq.s32.totalorder %s20, 0
      %p41 = por %p39, %p40
      %p42 = scmp.ne.s32.totalorder %s28, %s29
      %p43 = scmp.eq.s32.totalorder %s21, 1
      %p44 = por %p42, %p43
      %p46 = scmp.ne.s32.totalorder %s29, %s45
      %p47 = scmp.eq.s32.totalorder %s21, 0
      %p48 = por %p46, %p47
      %s50 = sadd.s32 %s49, 1
      %p53 = scmp.eq.s32.totalorder %s15, 1
      %p54 = scmp.ne.s32.totalorder %s49, %s51
      %p55 = scmp.eq.s32.totalorder %s15, 0
      %p56 = por %p54, %p55
      %p57 = scmp.ne.s32.totalorder %s49, %s51
      %p58 = scmp.eq.s32.totalorder %s20, 1
      %p59 = por %p57, %p58
      %p60 = scmp.ne.s32.totalorder %s51, %s52
      %p61 = scmp.eq.s32.totalorder %s20, 0
      %p62 = por %p60, %p61
      %p63 = scmp.ne.s32.totalorder %s51, %s52
      %p64 = scmp.eq.s32.totalorder %s21, 1
      %p65 = por %p63, %p64
      %p67 = scmp.ne.s32.totalorder %s52, %s66
      %p68 = scmp.eq.s32.totalorder %s21, 0
      %p69 = por %p67, %p68
      %s70 = ssub.s32 %s15, %s22
      %p71 = scmp.eq.s32.totalorder %s70, 0
      %s73 = sadd.s32 %s72, 1
      %s74 = scalar_select %p71, %s72, %s73
      %p77 = pneg %p71
      %p78 = scmp.eq.s32.totalorder %s15, 1
      %p79 = por %p77, %p78
      %p80 = scmp.ne.s32.totalorder %s72, %s75
      %p81 = scmp.eq.s32.totalorder %s15, 0
      %p82 = por %p80, %p81
      %p83 = scmp.ne.s32.totalorder %s72, %s75
      %p84 = scmp.eq.s32.totalorder %s20, 1
      %p85 = por %p83, %p84
      %p86 = scmp.ne.s32.totalorder %s75, %s76
      %p87 = scmp.eq.s32.totalorder %s20, 0
      %p88 = por %p86, %p87
      %p89 = scmp.ne.s32.totalorder %s75, %s76
      %p90 = scmp.eq.s32.totalorder %s21, 1
      %p91 = por %p89, %p90
      %p93 = scmp.ne.s32.totalorder %s76, %s92
      %p94 = scmp.eq.s32.totalorder %s21, 0
      %p95 = por %p93, %p94
      %p96 = scmp.le.s32.totalorder 1, %s15
      %p97 = scmp.lt.s32.totalorder %s15, 3
      %p98 = pnand %p96, %p97
      %p99 = pneg %p98
      // Predicated region
      $region9: #{tpu_custom_call.1} parent=5 // pred_check
        _
      $region10: #{tpu_custom_call.1} parent=5 // pred_check_branch
        %101 = sbr.rel (%p98) target = $region12
      $region11: #{tpu_custom_call.1} parent=5 // pred_region
        %s102 = ssub.s32 %s15, 1
        // Predicated region
        $region13: #{tpu_custom_call.1} parent=11 // pred_check
          %p103 = pneg %p62
        $region14: #{tpu_custom_call.1} parent=11 // pred_check_branch
          %105 = sbr.rel (%p103) target = $region16
        $region15: #{tpu_custom_call.1} parent=11 // pred_region
          %s107 = ssub.s32 80, 80
          %108 = vsyncadd [#allocation6], %s107
          %s110 = sshll.u32 [#allocation5], 4
          %s111 = int_to_ptr.vmem [resolvable:$true] %s110
          %113 = dma.hbm_to_vmem [thread:$0]  %s1, 80, %s111, [#allocation6]
        $region16: #{tpu_custom_call.1} parent=11 // pred_fallthru
          _
      $region12: #{tpu_custom_call.1} parent=5 // pred_fallthru
        _
      %p114 = scmp.lt.s32.totalorder %s15, 2
      // Predicated region
      $region17: #{tpu_custom_call.1} parent=5 // pred_check
        %p115 = pneg %p114
      $region18: #{tpu_custom_call.1} parent=5 // pred_check_branch
        %117 = sbr.rel (%p115) target = $region20
      $region19: #{tpu_custom_call.1} parent=5 // pred_region
        // Predicated region
        $region21: #{tpu_custom_call.1} parent=19 // pred_check
          %p118 = pneg %p35
        $region22: #{tpu_custom_call.1} parent=19 // pred_check_branch
          %120 = sbr.rel (%p118) target = $region24
        $region23: #{tpu_custom_call.1} parent=19 // pred_region
          %s121 = sand.u32 %s25, 1
          %s122 = scalar_lea.sflag [#allocation3], %s121
          %s123 = sand.u32 %s25, 1
          %s124 = smul.addr %s123, 560
          %s125 = scalar_lea.vmem [#allocation2], %s124
          %s126 = smul.u32 14, %s15
          %s127 = ssub.s32 25, %s126
          %p128 = scmp.lt.s32.totalorder %s127, 14
          %s129 = scalar_select %p128, %s127, 14
          %s130 = smul.u32 128, %s129
          %s131 = smul.u32 %s130, 5
          %s133 = ssub.s32 8960, %s131
          %134 = vsyncadd %s122, %s133
          %p135 = scmp.ne.s32.totalorder 0, %s131
          %s136 = smul.addr %s126, 5
          %s137 = smul.addr %s136, 128
          %s138 = scalar_lea.hbm %s0, %s137
          %s139 = smul.u32 40, %s129
          %s140 = sshll.u32 %s125, 4
          %s141 = int_to_ptr.vmem [resolvable:$true] %s140
          %s142 = sshll.u32 %s139, 4
          %146 = dma.hbm_to_vmem [thread:$0]  (%p135), %s138, %s142, %s141, %s122, 640, 640, 40
        $region24: #{tpu_custom_call.1} parent=19 // pred_fallthru
          _
      $region20: #{tpu_custom_call.1} parent=5 // pred_fallthru
        _
      %p147 = scmp.le.s32.totalorder 1, %s15
      %p148 = scmp.lt.s32.totalorder %s15, 3
      %p149 = pnand %p147, %p148
      %p150 = pneg %p149
      // Predicated region
      $region25: #{tpu_custom_call.1} parent=5 // pred_check
        _
      $region26: #{tpu_custom_call.1} parent=5 // pred_check_branch
        %152 = sbr.rel (%p149) target = $region28
      $region27: #{tpu_custom_call.1} parent=5 // pred_region
        %s153 = ssub.s32 %s15, 1
        %s154 = sand.u32 %s28, 1
        %s155 = scalar_lea.sflag [#allocation3], %s154
        %s156 = sand.u32 %s28, 1
        %s157 = smul.addr %s156, 560
        %s158 = scalar_lea.vmem [#allocation2], %s157
        // Predicated region
        $region29: #{tpu_custom_call.1} parent=27 // pred_check
          %p159 = pneg %p41
        $region30: #{tpu_custom_call.1} parent=27 // pred_check_branch
          %161 = sbr.rel (%p159) target = $region32
        $region31: #{tpu_custom_call.1} parent=27 // pred_region
          %162 = dma.done %s155, 8960
        $region32: #{tpu_custom_call.1} parent=27 // pred_fallthru
          _
        // Predicated region
        $region33: #{tpu_custom_call.1} parent=27 // pred_check
          %p163 = pneg %p62
        $region34: #{tpu_custom_call.1} parent=27 // pred_check_branch
          %165 = sbr.rel (%p163) target = $region36
        $region35: #{tpu_custom_call.1} parent=27 // pred_region
          %166 = dma.done [#allocation6], 80
        $region36: #{tpu_custom_call.1} parent=27 // pred_fallthru
          _
        %s167 = sand.u32 %s28, 1
        %s168 = scalar_lea.sflag [#allocation3], %s167
        %s169 = sand.u32 %s28, 1
        %s170 = smul.addr %s169, 560
        %s171 = scalar_lea.vmem [#allocation2], %s170
        %p172 = pneg %p41
        %p173 = pneg %p38
        %p174 = pneg %p62
        %p175 = pneg %p59
        %p176 = pneg %p88
        %p177 = pneg %p85
        %s178 = sand.u32 %s75, 1
        %s179 = scalar_lea.sflag [#allocation4], %s178
        %s180 = sand.u32 %s75, 1
        %s181 = scalar_lea.vmem [#allocation7], %s180
        %s182 = smul.u32 14, %s20
        %s183 = ssub.s32 25, %s182
        %p184 = scmp.lt.s32.totalorder %s183, 14
        %s185 = scalar_select %p184, %s183, 14
        %s186 = smul.u32 128, %s185
        %s187 = smul.u32 %s186, 5
        %v188 = vld [vmem:[#allocation5] sm:$0x1f]
        %v189 = vld [vmem:[%s158] sm:$0xff]
        %v190 = vld [vmem:[%s158 + $0x8] sm:$0xff]
        %v191 = vld [vmem:[%s158 + $0x10] sm:$0xff]
        %v192 = vld [vmem:[%s158 + $0x18] sm:$0xff]
        %v193 = vld [vmem:[%s158 + $0x20] sm:$0xff]
        %v194 = vld [vmem:[%s158 + $0x28] sm:$0xff]
        %v195 = vld [vmem:[%s158 + $0x30] sm:$0xff]
        %v196 = vld [vmem:[%s158 + $0x38] sm:$0xff]
        %v197 = vld [vmem:[%s158 + $0x40] sm:$0xff]
        %v198 = vld [vmem:[%s158 + $0x48] sm:$0xff]
        %v199 = vld [vmem:[%s158 + $0x50] sm:$0xff]
        %v200 = vld [vmem:[%s158 + $0x58] sm:$0xff]
        %v201 = vld [vmem:[%s158 + $0x60] sm:$0xff]
        %v202 = vld [vmem:[%s158 + $0x68] sm:$0xff]
        %v203 = vld [vmem:[%s158 + $0x70] sm:$0xff]
        %v204 = vld [vmem:[%s158 + $0x78] sm:$0xff]
        %v205 = vld [vmem:[%s158 + $0x80] sm:$0xff]
        %v206 = vld [vmem:[%s158 + $0x88] sm:$0xff]
        %v207 = vld [vmem:[%s158 + $0x90] sm:$0xff]
        %v208 = vld [vmem:[%s158 + $0x98] sm:$0xff]
        %v209 = vld [vmem:[%s158 + $0xa0] sm:$0xff]
        %v210 = vld [vmem:[%s158 + $0xa8] sm:$0xff]
        %v211 = vld [vmem:[%s158 + $0xb0] sm:$0xff]
        %v212 = vld [vmem:[%s158 + $0xb8] sm:$0xff]
        %v213 = vld [vmem:[%s158 + $0xc0] sm:$0xff]
        %v214 = vld [vmem:[%s158 + $0xc8] sm:$0xff]
        %v215 = vld [vmem:[%s158 + $0xd0] sm:$0xff]
        %v216 = vld [vmem:[%s158 + $0xd8] sm:$0xff]
        %v217 = vld [vmem:[%s158 + $0xe0] sm:$0xff]
        %v218 = vld [vmem:[%s158 + $0xe8] sm:$0xff]
        %v219 = vld [vmem:[%s158 + $0xf0] sm:$0xff]
        %v220 = vld [vmem:[%s158 + $0xf8] sm:$0xff]
        %v221 = vld [vmem:[%s158 + $0x100] sm:$0xff]
        %v222 = vld [vmem:[%s158 + $0x108] sm:$0xff]
        %v223 = vld [vmem:[%s158 + $0x110] sm:$0xff]
        %v224 = vld [vmem:[%s158 + $0x118] sm:$0xff]
        %v225 = vld [vmem:[%s158 + $0x120] sm:$0xff]
        %v226 = vld [vmem:[%s158 + $0x128] sm:$0xff]
        %v227 = vld [vmem:[%s158 + $0x130] sm:$0xff]
        %v228 = vld [vmem:[%s158 + $0x138] sm:$0xff]
        %v229 = vld [vmem:[%s158 + $0x140] sm:$0xff]
        %v230 = vld [vmem:[%s158 + $0x148] sm:$0xff]
        %v231 = vld [vmem:[%s158 + $0x150] sm:$0xff]
        %v232 = vld [vmem:[%s158 + $0x158] sm:$0xff]
        %v233 = vld [vmem:[%s158 + $0x160] sm:$0xff]
        %v234 = vld [vmem:[%s158 + $0x168] sm:$0xff]
        %v235 = vld [vmem:[%s158 + $0x170] sm:$0xff]
        %v236 = vld [vmem:[%s158 + $0x178] sm:$0xff]
        %v237 = vld [vmem:[%s158 + $0x180] sm:$0xff]
        %v238 = vld [vmem:[%s158 + $0x188] sm:$0xff]
        %v239 = vld [vmem:[%s158 + $0x190] sm:$0xff]
        %v240 = vld [vmem:[%s158 + $0x198] sm:$0xff]
        %v241 = vld [vmem:[%s158 + $0x1a0] sm:$0xff]
        %v242 = vld [vmem:[%s158 + $0x1a8] sm:$0xff]
        %v243 = vld [vmem:[%s158 + $0x1b0] sm:$0xff]
        %v244 = vld [vmem:[%s158 + $0x1b8] sm:$0xff]
        %v245 = vld [vmem:[%s158 + $0x1c0] sm:$0xff]
        %v246 = vld [vmem:[%s158 + $0x1c8] sm:$0xff]
        %v247 = vld [vmem:[%s158 + $0x1d0] sm:$0xff]
        %v248 = vld [vmem:[%s158 + $0x1d8] sm:$0xff]
        %v249 = vld [vmem:[%s158 + $0x1e0] sm:$0xff]
        %v250 = vld [vmem:[%s158 + $0x1e8] sm:$0xff]
        %v251 = vld [vmem:[%s158 + $0x1f0] sm:$0xff]
        %v252 = vld [vmem:[%s158 + $0x1f8] sm:$0xff]
        %v253 = vld [vmem:[%s158 + $0x200] sm:$0xff]
        %v254 = vld [vmem:[%s158 + $0x208] sm:$0xff]
        %v255 = vld [vmem:[%s158 + $0x210] sm:$0xff]
        %v256 = vld [vmem:[%s158 + $0x218] sm:$0xff]
        %v257 = vld [vmem:[%s158 + $0x220] sm:$0xff]
        %v258 = vld [vmem:[%s158 + $0x228] sm:$0xff]
        %v260 = vlaneseq
        %v261 = vshrl.u32 %v260, 7
        %v262 = vsub.s32 0, %v261
        %v263 = vrot.slane %v188, %v262
        %v264 = vlaneseq
        %v265 = vshrl.u32 %v264, 7
        %v266 = vsub.s32 1, %v265
        %v267 = vrot.slane %v188, %v266
        %v268 = vlaneseq
        %v269 = vshrl.u32 %v268, 7
        %v270 = vsub.s32 2, %v269
        %v271 = vrot.slane %v188, %v270
        %v272 = vlaneseq
        %v273 = vshrl.u32 %v272, 7
        %v274 = vsub.s32 3, %v273
        %v275 = vrot.slane %v188, %v274
        %v276 = vlaneseq
        %v277 = vshrl.u32 %v276, 7
        %v278 = vsub.s32 4, %v277
        %v279 = vrot.slane %v188, %v278
        %vm284 = vcmask 523264
        %v285 = vsel %vm284, %v279, 0
        %v288 = vsel %vm284, %v193, 0
        %v291 = vsel %vm284, %v198, 0
        %v294 = vsel %vm284, %v203, 0
        %v297 = vsel %vm284, %v208, 0
        %v300 = vsel %vm284, %v213, 0
        %v303 = vsel %vm284, %v218, 0
        %v306 = vsel %vm284, %v223, 0
        %v309 = vsel %vm284, %v228, 0
        %v312 = vsel %vm284, %v233, 0
        %v315 = vsel %vm284, %v238, 0
        %v318 = vsel %vm284, %v243, 0
        %v321 = vsel %vm284, %v248, 0
        %v324 = vsel %vm284, %v253, 0
        %v327 = vsel %vm284, %v258, 0
        %329 = vmatprep.subr.mxu0 %v190
        %330 = vmatpush1.xpose.msra.mxu0 %v189
        %331 = vmatprep.subr.mxu0 %v195
        %332 = vmatpush1.xpose.msra.mxu0 %v194
        %333 = vmatprep.subr.mxu0 %v200
        %334 = vmatpush1.xpose.msra.mxu0 %v199
        %335 = vmatprep.subr.mxu0 %v205
        %336 = vmatpush1.xpose.msra.mxu0 %v204
        %337 = vmatprep.subr.mxu0 %v210
        %338 = vmatpush1.xpose.msra.mxu0 %v209
        %339 = vmatprep.subr.mxu0 %v215
        %340 = vmatpush1.xpose.msra.mxu0 %v214
        %341 = vmatprep.subr.mxu0 %v220
        %342 = vmatpush1.xpose.msra.mxu0 %v219
        %343 = vmatprep.subr.mxu0 %v225
        %344 = vmatpush1.xpose.msra.mxu0 %v224
        %345 = vmatprep.subr.mxu0 %v230
        %346 = vmatpush1.xpose.msra.mxu0 %v229
        %347 = vmatprep.subr.mxu0 %v235
        %348 = vmatpush1.xpose.msra.mxu0 %v234
        %349 = vmatprep.subr.mxu0 %v240
        %350 = vmatpush1.xpose.msra.mxu0 %v239
        %351 = vmatprep.subr.mxu0 %v245
        %352 = vmatpush1.xpose.msra.mxu0 %v244
        %353 = vmatprep.subr.mxu0 %v250
        %354 = vmatpush1.xpose.msra.mxu0 %v249
        %355 = vmatprep.subr.mxu0 %v255
        %356 = vmatpush1.xpose.msra.mxu0 %v254
        %357 = vmatprep.subr.mxu0 0.0
        %358 = vmatpush1.xpose.msra.mxu0 0.0
        %359 = vmatprep.subr.mxu0 0.0
        %360 = vmatpush1.xpose.msra.mxu0 0.0
        %361 = vmatprep.subr.mxu0 0.0
        %362 = vmatpush1.xpose.msra.mxu0 0.0
        %363 = vmatprep.subr.mxu0 0.0
        %364 = vmatpush1.xpose.msra.mxu0 0.0
        %365 = vmatprep.subr.mxu0 0.0
        %366 = vmatpush1.xpose.msra.mxu0 0.0
        %367 = vmatprep.subr.mxu0 0.0
        %368 = vmatpush1.xpose.msra.mxu0 0.0
        %369 = vmatprep.subr.mxu0 0.0
        %370 = vmatpush1.xpose.msra.mxu0 0.0
        %371 = vmatprep.subr.mxu0 0.0
        %372 = vmatpush1.xpose.msra.mxu0 0.0
        %373 = vmatprep.subr.mxu0 0.0
        %374 = vmatpush1.xpose.msra.mxu0 0.0
        %375 = vmatprep.subr.mxu0 0.0
        %376 = vmatpush1.xpose.msra.mxu0 0.0
        %377 = vmatprep.subr.mxu0 0.0
        %378 = vmatpush1.xpose.msra.mxu0 0.0
        %379 = vmatprep.subr.mxu0 0.0
        %380 = vmatpush1.xpose.msra.mxu0 0.0
        %381 = vmatprep.subr.mxu0 0.0
        %382 = vmatpush1.xpose.msra.mxu0 0.0
        %383 = vmatprep.subr.mxu0 0.0
        %384 = vmatpush1.xpose.msra.mxu0 0.0
        %385 = vmatprep.subr.mxu0 0.0
        %386 = vmatpush1.xpose.msra.mxu0 0.0
        %387 = vmatprep.subr.mxu0 0.0
        %388 = vmatpush1.xpose.msra.mxu0 0.0
        %389 = vmatprep.subr.mxu0 0.0
        %390 = vmatpush1.xpose.msra.mxu0 0.0
        %391 = vmatprep.subr.mxu0 0.0
        %392 = vmatpush1.xpose.msra.mxu0 0.0
        %393 = vmatprep.mubr.f32.mxu0 %v267
        %394 = vmatmul.mubr.f32.gmra.mrb[0].mxu0 %v263
        %v395 = vpop.f32.mrb[0].mxu0
        %v396 = vadd.f32 0.0, %v395
        %v397 = vpop.f32.mrb[0].mxu0
        %398 = vdwg.mxu0
        %399 = vmatprep.subr.mxu0 %v192
        %400 = vmatpush1.xpose.msra.mxu0 %v191
        %401 = vmatprep.subr.mxu0 %v197
        %402 = vmatpush1.xpose.msra.mxu0 %v196
        %403 = vmatprep.subr.mxu0 %v202
        %404 = vmatpush1.xpose.msra.mxu0 %v201
        %405 = vmatprep.subr.mxu0 %v207
        %406 = vmatpush1.xpose.msra.mxu0 %v206
        %407 = vmatprep.subr.mxu0 %v212
        %408 = vmatpush1.xpose.msra.mxu0 %v211
        %409 = vmatprep.subr.mxu0 %v217
        %410 = vmatpush1.xpose.msra.mxu0 %v216
        %411 = vmatprep.subr.mxu0 %v222
        %412 = vmatpush1.xpose.msra.mxu0 %v221
        %413 = vmatprep.subr.mxu0 %v227
        %414 = vmatpush1.xpose.msra.mxu0 %v226
        %415 = vmatprep.subr.mxu0 %v232
        %416 = vmatpush1.xpose.msra.mxu0 %v231
        %417 = vmatprep.subr.mxu0 %v237
        %418 = vmatpush1.xpose.msra.mxu0 %v236
        %419 = vmatprep.subr.mxu0 %v242
        %420 = vmatpush1.xpose.msra.mxu0 %v241
        %421 = vmatprep.subr.mxu0 %v247
        %422 = vmatpush1.xpose.msra.mxu0 %v246
        %423 = vmatprep.subr.mxu0 %v252
        %424 = vmatpush1.xpose.msra.mxu0 %v251
        %425 = vmatprep.subr.mxu0 %v257
        %426 = vmatpush1.xpose.msra.mxu0 %v256
        %427 = vmatprep.subr.mxu0 0.0
        %428 = vmatpush1.xpose.msra.mxu0 0.0
        %429 = vmatprep.subr.mxu0 0.0
        %430 = vmatpush1.xpose.msra.mxu0 0.0
        %431 = vmatprep.subr.mxu0 0.0
        %432 = vmatpush1.xpose.msra.mxu0 0.0
        %433 = vmatprep.subr.mxu0 0.0
        %434 = vmatpush1.xpose.msra.mxu0 0.0
        %435 = vmatprep.subr.mxu0 0.0
        %436 = vmatpush1.xpose.msra.mxu0 0.0
        %437 = vmatprep.subr.mxu0 0.0
        %438 = vmatpush1.xpose.msra.mxu0 0.0
        %439 = vmatprep.subr.mxu0 0.0
        %440 = vmatpush1.xpose.msra.mxu0 0.0
        %441 = vmatprep.subr.mxu0 0.0
        %442 = vmatpush1.xpose.msra.mxu0 0.0
        %443 = vmatprep.subr.mxu0 0.0
        %444 = vmatpush1.xpose.msra.mxu0 0.0
        %445 = vmatprep.subr.mxu0 0.0
        %446 = vmatpush1.xpose.msra.mxu0 0.0
        %447 = vmatprep.subr.mxu0 0.0
        %448 = vmatpush1.xpose.msra.mxu0 0.0
        %449 = vmatprep.subr.mxu0 0.0
        %450 = vmatpush1.xpose.msra.mxu0 0.0
        %451 = vmatprep.subr.mxu0 0.0
        %452 = vmatpush1.xpose.msra.mxu0 0.0
        %453 = vmatprep.subr.mxu0 0.0
        %454 = vmatpush1.xpose.msra.mxu0 0.0
        %455 = vmatprep.subr.mxu0 0.0
        %456 = vmatpush1.xpose.msra.mxu0 0.0
        %457 = vmatprep.subr.mxu0 0.0
        %458 = vmatpush1.xpose.msra.mxu0 0.0
        %459 = vmatprep.subr.mxu0 0.0
        %460 = vmatpush1.xpose.msra.mxu0 0.0
        %461 = vmatprep.subr.mxu0 0.0
        %462 = vmatpush1.xpose.msra.mxu0 0.0
        %463 = vmatprep.mubr.f32.mxu0 %v275
        %464 = vmatmul.mubr.f32.gmra.mrb[0].mxu0 %v271
        %v465 = vpop.f32.mrb[0].mxu0
        %v466 = vadd.f32 %v396, %v465
        %v467 = vpop.f32.mrb[0].mxu0
        %468 = vdwg.mxu0
        %469 = vmatprep.subr.mxu0 0.0
        %470 = vmatpush1.xpose.msra.mxu0 %v288
        %471 = vmatprep.subr.mxu0 0.0
        %472 = vmatpush1.xpose.msra.mxu0 %v291
        %473 = vmatprep.subr.mxu0 0.0
        %474 = vmatpush1.xpose.msra.mxu0 %v294
        %475 = vmatprep.subr.mxu0 0.0
        %476 = vmatpush1.xpose.msra.mxu0 %v297
        %477 = vmatprep.subr.mxu0 0.0
        %478 = vmatpush1.xpose.msra.mxu0 %v300
        %479 = vmatprep.subr.mxu0 0.0
        %480 = vmatpush1.xpose.msra.mxu0 %v303
        %481 = vmatprep.subr.mxu0 0.0
        %482 = vmatpush1.xpose.msra.mxu0 %v306
        %483 = vmatprep.subr.mxu0 0.0
        %484 = vmatpush1.xpose.msra.mxu0 %v309
        %485 = vmatprep.subr.mxu0 0.0
        %486 = vmatpush1.xpose.msra.mxu0 %v312
        %487 = vmatprep.subr.mxu0 0.0
        %488 = vmatpush1.xpose.msra.mxu0 %v315
        %489 = vmatprep.subr.mxu0 0.0
        %490 = vmatpush1.xpose.msra.mxu0 %v318
        %491 = vmatprep.subr.mxu0 0.0
        %492 = vmatpush1.xpose.msra.mxu0 %v321
        %493 = vmatprep.subr.mxu0 0.0
        %494 = vmatpush1.xpose.msra.mxu0 %v324
        %495 = vmatprep.subr.mxu0 0.0
        %496 = vmatpush1.xpose.msra.mxu0 %v327
        %497 = vmatprep.subr.mxu0 0.0
        %498 = vmatpush1.xpose.msra.mxu0 0.0
        %499 = vmatprep.subr.mxu0 0.0
        %500 = vmatpush1.xpose.msra.mxu0 0.0
        %501 = vmatprep.subr.mxu0 0.0
        %502 = vmatpush1.xpose.msra.mxu0 0.0
        %503 = vmatprep.subr.mxu0 0.0
        %504 = vmatpush1.xpose.msra.mxu0 0.0
        %505 = vmatprep.subr.mxu0 0.0
        %506 = vmatpush1.xpose.msra.mxu0 0.0
        %507 = vmatprep.subr.mxu0 0.0
        %508 = vmatpush1.xpose.msra.mxu0 0.0
        %509 = vmatprep.subr.mxu0 0.0
        %510 = vmatpush1.xpose.msra.mxu0 0.0
        %511 = vmatprep.subr.mxu0 0.0
        %512 = vmatpush1.xpose.msra.mxu0 0.0
        %513 = vmatprep.subr.mxu0 0.0
        %514 = vmatpush1.xpose.msra.mxu0 0.0
        %515 = vmatprep.subr.mxu0 0.0
        %516 = vmatpush1.xpose.msra.mxu0 0.0
        %517 = vmatprep.subr.mxu0 0.0
        %518 = vmatpush1.xpose.msra.mxu0 0.0
        %519 = vmatprep.subr.mxu0 0.0
        %520 = vmatpush1.xpose.msra.mxu0 0.0
        %521 = vmatprep.subr.mxu0 0.0
        %522 = vmatpush1.xpose.msra.mxu0 0.0
        %523 = vmatprep.subr.mxu0 0.0
        %524 = vmatpush1.xpose.msra.mxu0 0.0
        %525 = vmatprep.subr.mxu0 0.0
        %526 = vmatpush1.xpose.msra.mxu0 0.0
        %527 = vmatprep.subr.mxu0 0.0
        %528 = vmatpush1.xpose.msra.mxu0 0.0
        %529 = vmatprep.subr.mxu0 0.0
        %530 = vmatpush1.xpose.msra.mxu0 0.0
        %531 = vmatprep.subr.mxu0 0.0
        %532 = vmatpush1.xpose.msra.mxu0 0.0
        %533 = vmatprep.mubr.f32.mxu0 0.0
        %534 = vmatmul.mubr.f32.gmra.mrb[0].mxu0 %v285
        %v535 = vpop.f32.mrb[0].mxu0
        %v536 = vadd.f32 %v466, %v535
        %v537 = vpop.f32.mrb[0].mxu0
        %538 = vdwg.mxu0
        %vm539 = vcmask 909312
        %540 = vst.msk [vmem:[%s181] sm:$0x1] %vm539, %v536
        %s541 = sand.u32 %s75, 1
        %s542 = scalar_lea.sflag [#allocation4], %s541
        %s543 = sand.u32 %s75, 1
        %s544 = scalar_lea.vmem [#allocation7], %s543
        // Predicated region
        $region37: #{tpu_custom_call.1} parent=27 // pred_check
          %p545 = pneg %p85
        $region38: #{tpu_custom_call.1} parent=27 // pred_check_branch
          %547 = sbr.rel (%p545) target = $region40
        $region39: #{tpu_custom_call.1} parent=27 // pred_region
          %s549 = ssub.s32 16, 16
          %550 = vsyncadd %s542, %s549
          %s551 = smul.addr %s20, 16
          %s552 = scalar_lea.hbm %s2, %s551
          %s554 = sshll.u32 %s544, 4
          %s555 = int_to_ptr.vmem [resolvable:$true] %s554
          %557 = dma.vmem_to_hbm [thread:$0]  %s555, 16, %s552, %s542
        $region40: #{tpu_custom_call.1} parent=27 // pred_fallthru
          _
      $region28: #{tpu_custom_call.1} parent=5 // pred_fallthru
        _
      %p558 = scmp.le.s32.totalorder 2, %s15
      // Predicated region
      $region41: #{tpu_custom_call.1} parent=5 // pred_check
        %p559 = pneg %p558
      $region42: #{tpu_custom_call.1} parent=5 // pred_check_branch
        %561 = sbr.rel (%p559) target = $region44
      $region43: #{tpu_custom_call.1} parent=5 // pred_region
        %s562 = ssub.s32 %s15, 2
        // Predicated region
        $region45: #{tpu_custom_call.1} parent=43 // pred_check
          %p563 = pneg %p91
        $region46: #{tpu_custom_call.1} parent=43 // pred_check_branch
          %565 = sbr.rel (%p563) target = $region48
        $region47: #{tpu_custom_call.1} parent=43 // pred_region
          %s566 = sand.u32 %s76, 1
          %s567 = scalar_lea.sflag [#allocation4], %s566
          %s568 = sand.u32 %s76, 1
          %s569 = scalar_lea.vmem [#allocation7], %s568
          %570 = dma.done %s567, 16
        $region48: #{tpu_custom_call.1} parent=43 // pred_fallthru
          _
      $region44: #{tpu_custom_call.1} parent=5 // pred_fallthru
        _
    $region6: #{tpu_custom_call.1} parent=1 // loop_footer
      %s19 = sadd.s32 1, %s15
    $region7: #{tpu_custom_call.1} parent=1 // loop_footer_branch
      %14 = sbr.rel target = $region3
    $region8: #{tpu_custom_call.1} parent=1 // loop_exit
      _
    %571 = vsyncpa [#allocation3], 1
    %s572 = scalar_lea.sflag [#allocation3], 1
    %573 = vsyncpa %s572, 1
    %574 = vsyncpa [#allocation6], 1
    %575 = vsyncpa [#allocation4], 1
    %s576 = scalar_lea.sflag [#allocation4], 1
    %577 = vsyncpa %s576, 1

</llo_original>
